<compile_context>
chip_gen: v7x
topology: tpu7x:2x2x1
jax: 0.10.0
libtpu: 0.0.40
codegen_flags: <defaults>
</compile_context>

<pallas_src>
import jax
import jax.numpy as jnp
import numpy as np
from jax.experimental import pallas as pl
from jax.experimental.pallas import tpu as pltpu

# Feature-column indices (gridfm_graphkit globals, re-declared in-script).
PD, QD, PG, QG, VM, VA = 0, 1, 2, 3, 4, 5
# Edge-attribute columns: conductance G and susceptance B of each Y-bus entry.
EG, EB = 0, 1


def _round_up(x, m):
    return ((x + m - 1) // m) * m


# ---------------------------------------------------------------------------
# PBE (power balance equation) loss — Pallas matvec kernel + XLA epilogue
# ---------------------------------------------------------------------------
def _pbe_matvec_kernel(u_ref, mt_ref, out_ref):
    """out(8, tm) += U(8, tk) @ MT(tk, tm).

    Grid = (row_tiles ["parallel"], k_tiles ["arbitrary"]).  The output block
    index only depends on the row tile, so it stays resident in VMEM across
    the K (reduction) axis and acts as the accumulator.
    """
    @pl.when(pl.program_id(1) == 0)
    def _init():
        out_ref[...] = jnp.zeros_like(out_ref)

    out_ref[...] += jnp.dot(u_ref[...], mt_ref[...],
                            preferred_element_type=jnp.float32)


def _pbe_tiles(n):
    """Pick (n_pad, tm, tk) so tm | n_pad, tk | 2*n_pad and grid_m >= 2."""
    if n <= 256:
        n_pad, tm = 256, 128          # 2 row tiles -> both v7x TCs busy
    else:
        n_pad = _round_up(n, 512)
        tm = 256 if n_pad == 512 else 512
    k_total = 2 * n_pad
    tk = min(1024, k_total)           # MT tile up to 1024x512 f32 = 2 MiB
    return n_pad, tm, tk


def pbe_loss(pred, target, edge_index=None, edge_attr=None, mask=None):
    """JAX/Pallas equivalent of gridfm_graphkit PBELoss.forward."""
    n, _ = target.shape
    pred = pred.astype(jnp.float32)
    target = target.astype(jnp.float32)
    mask_b = mask.astype(jnp.bool_)

    # --- O(N) prologue in XLA: rectangular voltage + net injections ---------
    temp = jnp.where(mask_b, pred, target)
    vm = temp[:, VM]
    va = temp[:, VA]
    vr = vm * jnp.cos(va)
    vi = vm * jnp.sin(va)
    net_p = temp[:, PG] - temp[:, PD]
    net_q = temp[:, QG] - temp[:, QD]

    n_pad, tm, tk = _pbe_tiles(n)
    k_total = 2 * n_pad
    pad = n_pad - n
    grid_m = n_pad // tm
    grid_k = k_total // tk

    vr_p = jnp.pad(vr, (0, pad))
    vi_p = jnp.pad(vi, (0, pad))

    # LHS U (8, 2*n_pad):  row0 = [vr | -vi],  row1 = [vi | vr], rest zero.
    # U @ [G^T ; B^T] -> row0 = (G vr - B vi)^T = Ar^T,
    #                    row1 = (G vi + B vr)^T = (-Ai)^T.
    u = jnp.zeros((8, k_total), jnp.float32)
    u = u.at[0, :n_pad].set(vr_p)
    u = u.at[0, n_pad:].set(-vi_p)
    u = u.at[1, :n_pad].set(vi_p)
    u = u.at[1, n_pad:].set(vr_p)

    # MT = [G^T ; B^T]  (dense Y-bus, transposed so the matmul is lane-dense).
    # TODO(synk): O(N^2) scatter build on every call; cache across calls or
    #             keep the matvec sparse for realistic grid sizes.
    rows, cols = edge_index[0], edge_index[1]
    g_vals = edge_attr[:, EG].astype(jnp.float32)
    b_vals = edge_attr[:, EB].astype(jnp.float32)
    mt = jnp.zeros((k_total, n_pad), jnp.float32)
    mt = mt.at[cols, rows].add(g_vals)
    mt = mt.at[cols + n_pad, rows].add(b_vals)

    cost = pl.CostEstimate(
        flops=int(2 * 8 * k_total * n_pad),
        transcendentals=0,
        bytes_accessed=int(k_total * n_pad * 4          # MT streamed once
                           + grid_m * 8 * k_total * 4   # U re-read per row tile
                           + 8 * n_pad * 4),            # output
    )

    res = pl.pallas_call(
        _pbe_matvec_kernel,
        out_shape=jax.ShapeDtypeStruct((8, n_pad), jnp.float32),
        grid_spec=pltpu.PrefetchScalarGridSpec(
            num_scalar_prefetch=0,
            grid=(grid_m, grid_k),                       # K (reduction) last
            in_specs=[
                pl.BlockSpec((8, tk), lambda i, k: (0, k)),    # U K-slice
                pl.BlockSpec((tk, tm), lambda i, k: (k, i)),   # MT tile
            ],
            out_specs=pl.BlockSpec((8, tm), lambda i, k: (0, i)),
        ),
        compiler_params=pltpu.CompilerParams(
            dimension_semantics=("parallel", "arbitrary"),
            vmem_limit_bytes=48 * 1024 * 1024),
        cost_estimate=cost,
    )(u, mt)

    # --- O(N) epilogue in XLA ----------------------------------------------
    ar = res[0, :n]
    ai = -res[1, :n]
    s_inj_r = vr * ar - vi * ai          # Re(diag(V) conj(Y) conj(V))
    s_inj_i = vr * ai + vi * ar          # Im(...)
    dr = net_p - s_inj_r
    di = net_q - s_inj_i

    inv_n = jnp.float32(1.0 / n)
    loss = jnp.sum(jnp.sqrt(dr * dr + di * di)) * inv_n
    real_l = jnp.sum(jnp.abs(dr)) * inv_n
    imag_l = jnp.sum(jnp.abs(di)) * inv_n

    # TODO(synk): PyTorch returns .item() host-synced floats for the detail
    # entries; here they are device scalars (same values).
    return {
        "loss": loss,
        "Power power loss in p.u.": loss,
        "Active Power Loss in p.u.": real_l,
        "Reactive Power Loss in p.u.": imag_l,
    }


# ---------------------------------------------------------------------------
# Masked MSE loss kernel (lane-dense flattened slab)
# ---------------------------------------------------------------------------
def _masked_mse_kernel(pred_ref, target_ref, mask_ref, out_ref):
    m = mask_ref[...]
    d = jnp.where(m != 0.0, pred_ref[...] - target_ref[...], 0.0)
    sq = jnp.sum(d * d, axis=0, keepdims=True)       # (1, 128) per-lane partial
    cnt = jnp.sum(m, axis=0, keepdims=True)          # (1, 128) per-lane partial
    sub = jax.lax.broadcasted_iota(jnp.int32, (8, 128), 0)
    out_ref[...] = (jnp.where(sub == 0, sq, 0.0)
                    + jnp.where(sub == 1, cnt, 0.0))


def _mse_tiles(rows):
    if rows <= 16:
        tr = _round_up(max(rows, 8), 8)
    elif rows <= 4096:
        tr = _round_up(-(-rows // 2), 8)      # >=2 parallel tiles (v7x)
    else:
        tr = 2048                             # 1 MiB per input per step
    rows_p = _round_up(rows, tr)
    return rows_p, tr


def masked_mse_loss(pred, target, edge_index=None, edge_attr=None, mask=None):
    """Masked MSE: mean of squared error over masked entries."""
    n, f = target.shape
    pred_f = jnp.ravel(pred.astype(jnp.float32))
    target_f = jnp.ravel(target.astype(jnp.float32))
    mask_f = jnp.ravel(mask.astype(jnp.float32))

    total = n * f
    lanes = 128
    rows = -(-total // lanes)
    rows_p, tr = _mse_tiles(rows)
    grid_m = rows_p // tr
    pad = rows_p * lanes - total

    def _slab(x):
        return jnp.pad(x, (0, pad)).reshape(rows_p, lanes)

    pred_s, target_s, mask_s = _slab(pred_f), _slab(target_f), _slab(mask_f)

    row_spec = pl.BlockSpec((tr, lanes), lambda i: (i, 0))
    partials = pl.pallas_call(
        _masked_mse_kernel,
        out_shape=jax.ShapeDtypeStruct((grid_m * 8, lanes), jnp.float32),
        grid_spec=pltpu.PrefetchScalarGridSpec(
            num_scalar_prefetch=0,
            grid=(grid_m,),
            in_specs=[row_spec, row_spec, row_spec],
            out_specs=pl.BlockSpec((8, lanes), lambda i: (i, 0)),
        ),
        compiler_params=pltpu.CompilerParams(dimension_semantics=("parallel",)),
        cost_estimate=pl.CostEstimate(
            flops=int(5 * rows_p * lanes), transcendentals=0,
            bytes_accessed=int(3 * rows_p * lanes * 4 + grid_m * 8 * lanes * 4)),
    )(pred_s, target_s, mask_s)

    p = partials.reshape(grid_m, 8, lanes)
    s_sq = jnp.sum(p[:, 0, :])
    s_cnt = jnp.sum(p[:, 1, :])
    loss = s_sq / jnp.maximum(s_cnt, 1.0)
    return {"loss": loss, "MSE loss in p.u.": loss}


# ---------------------------------------------------------------------------
# MixedLoss: weighted sum of component losses (mirrors MixedLoss.forward)
# ---------------------------------------------------------------------------
class MixedLossPallas:
    def __init__(self, loss_functions, weights):
        if len(loss_functions) != len(weights):
            raise ValueError(
                "The number of loss functions must match the number of weights.")
        self.loss_functions = list(loss_functions)
        self.weights = list(weights)

    def __call__(self, pred, target, edge_index=None, edge_attr=None, mask=None):
        total_loss = jnp.float32(0.0)
        loss_details = {}
        for w, loss_fn in zip(self.weights, self.loss_functions):
            loss_output = dict(loss_fn(pred, target, edge_index=edge_index,
                                       edge_attr=edge_attr, mask=mask))
            individual_loss = loss_output.pop("loss")
            total_loss = total_loss + w * individual_loss
            for key, val in loss_output.items():
                loss_details[key] = val
        loss_details["loss"] = total_loss
        return loss_details


if __name__ == "__main__":
    key = jax.random.PRNGKey(0)
    kp, kt, km, kei, kea = jax.random.split(key, 5)

    N, F, E = 8, 6, 16  # nodes, node-feature columns, edges
    pred = jax.random.normal(kp, (N, F), dtype=jnp.float32)
    target = jax.random.normal(kt, (N, F), dtype=jnp.float32)
    mask = jax.random.bernoulli(km, 0.5, (N, F))
    edge_index = jax.random.randint(kei, (2, E), 0, N)
    edge_attr = jax.random.normal(kea, (E, 2), dtype=jnp.float32)

    weights = [1.0, 0.25]
    mixed = MixedLossPallas([masked_mse_loss, pbe_loss], weights)
    out = mixed(pred, target, edge_index=edge_index, edge_attr=edge_attr,
                mask=mask)
    jax.block_until_ready(out)

    # --- pure-numpy reference --------------------------------------------
    pred_np = np.asarray(pred, dtype=np.float64)
    target_np = np.asarray(target, dtype=np.float64)
    mask_np = np.asarray(mask)
    ei = np.asarray(edge_index)
    ea = np.asarray(edge_attr, dtype=np.float64)

    # masked MSE
    m = mask_np.astype(np.float64)
    diff = (pred_np - target_np) * m
    ref_mse = (diff ** 2).sum() / max(m.sum(), 1.0)

    # PBE
    tp = np.where(mask_np, pred_np, target_np)
    V = tp[:, VM] * np.exp(1j * tp[:, VA])
    Y = np.zeros((N, N), dtype=np.complex128)
    np.add.at(Y, (ei[0], ei[1]), ea[:, EG] + 1j * ea[:, EB])
    S_inj = V * (np.conj(Y) @ np.conj(V))
    S_net = (tp[:, PG] - tp[:, PD]) + 1j * (tp[:, QG] - tp[:, QD])
    d = S_net - S_inj
    ref_pbe = np.mean(np.abs(d))
    ref_real = np.mean(np.abs(np.real(d)))
    ref_imag = np.mean(np.abs(np.imag(d)))

    ref_total = weights[0] * ref_mse + weights[1] * ref_pbe

    assert np.allclose(float(out["MSE loss in p.u."]), ref_mse,
                       rtol=1e-4, atol=1e-4)
    assert np.allclose(float(out["Power power loss in p.u."]), ref_pbe,
                       rtol=1e-4, atol=1e-4)
    assert np.allclose(float(out["Active Power Loss in p.u."]), ref_real,
                       rtol=1e-4, atol=1e-4)
    assert np.allclose(float(out["Reactive Power Loss in p.u."]), ref_imag,
                       rtol=1e-4, atol=1e-4)
    assert np.allclose(float(out["loss"]), ref_total, rtol=1e-4, atol=1e-4)

    print("KERNEL_OK")
</pallas_src>

<mosaic_0001>
module attributes {stable_mosaic.version = 11 : i64} {
  func.func @_masked_mse_kernel(%arg0: i32, %arg1: memref<8x128xf32, #tpu.memory_space<vmem>>, %arg2: memref<8x128xf32, #tpu.memory_space<vmem>>, %arg3: memref<8x128xf32, #tpu.memory_space<vmem>>, %arg4: memref<8x128xf32, #tpu.memory_space<vmem>>) attributes {dimension_semantics = [#tpu.dimension_semantics<parallel>], iteration_bounds = array<i64: 1>, scalar_prefetch = 0 : i64, scratch_operands = 0 : i64, tpu.core_type = #tpu.core_type<tc>, window_params = [{transform_indices = @transform_0, window_bounds = array<i64: 8, 128>}, {transform_indices = @transform_1, window_bounds = array<i64: 8, 128>}, {transform_indices = @transform_2, window_bounds = array<i64: 8, 128>}, {transform_indices = @transform_3, window_bounds = array<i64: 8, 128>}]} {
    %c0 = arith.constant 0 : index
    %c0_0 = arith.constant 0 : index
    %0 = vector.load %arg3[%c0, %c0_0] : memref<8x128xf32, #tpu.memory_space<vmem>>, vector<8x128xf32>
    %cst = arith.constant 0.000000e+00 : f32
    %1 = vector.broadcast %cst : f32 to vector<8x128xf32>
    %2 = arith.cmpf one, %0, %1 : vector<8x128xf32>
    %c0_1 = arith.constant 0 : index
    %c0_2 = arith.constant 0 : index
    %3 = vector.load %arg1[%c0_1, %c0_2] : memref<8x128xf32, #tpu.memory_space<vmem>>, vector<8x128xf32>
    %c0_3 = arith.constant 0 : index
    %c0_4 = arith.constant 0 : index
    %4 = vector.load %arg2[%c0_3, %c0_4] : memref<8x128xf32, #tpu.memory_space<vmem>>, vector<8x128xf32>
    %5 = arith.subf %3, %4 : vector<8x128xf32>
    %cst_5 = arith.constant 0.000000e+00 : f32
    %6 = vector.broadcast %cst_5 : f32 to vector<8x128xf32>
    %7 = arith.select %2, %5, %6 : vector<8x128xi1>, vector<8x128xf32>
    %8 = arith.mulf %7, %7 : vector<8x128xf32>
    %cst_6 = arith.constant dense<0.000000e+00> : vector<128xf32>
    %9 = vector.multi_reduction <add>, %8, %cst_6 [0] : vector<8x128xf32> to vector<128xf32>
    %10 = vector.shape_cast %9 : vector<128xf32> to vector<1x128xf32>
    %cst_7 = arith.constant dense<0.000000e+00> : vector<128xf32>
    %11 = vector.multi_reduction <add>, %0, %cst_7 [0] : vector<8x128xf32> to vector<128xf32>
    %12 = vector.shape_cast %11 : vector<128xf32> to vector<1x128xf32>
    %13 = tpu.iota {dimensions = array<i32: 0>} : vector<8x128xi32>
    %c0_i32 = arith.constant 0 : i32
    %14 = vector.broadcast %c0_i32 : i32 to vector<8x128xi32>
    %15 = arith.cmpi eq, %13, %14 : vector<8x128xi32>
    %cst_8 = arith.constant 0.000000e+00 : f32
    %16 = vector.shape_cast %10 : vector<1x128xf32> to vector<1x128xf32>
    %17 = vector.broadcast %16 : vector<1x128xf32> to vector<8x128xf32>
    %18 = vector.broadcast %cst_8 : f32 to vector<8x128xf32>
    %19 = arith.select %15, %17, %18 : vector<8x128xi1>, vector<8x128xf32>
    %c1_i32 = arith.constant 1 : i32
    %20 = vector.broadcast %c1_i32 : i32 to vector<8x128xi32>
    %21 = arith.cmpi eq, %13, %20 : vector<8x128xi32>
    %cst_9 = arith.constant 0.000000e+00 : f32
    %22 = vector.shape_cast %12 : vector<1x128xf32> to vector<1x128xf32>
    %23 = vector.broadcast %22 : vector<1x128xf32> to vector<8x128xf32>
    %24 = vector.broadcast %cst_9 : f32 to vector<8x128xf32>
    %25 = arith.select %21, %23, %24 : vector<8x128xi1>, vector<8x128xf32>
    %26 = arith.addf %19, %25 : vector<8x128xf32>
    %c0_10 = arith.constant 0 : index
    %c0_11 = arith.constant 0 : index
    %27 = vector.load %arg4[%c0_10, %c0_11] : memref<8x128xf32, #tpu.memory_space<vmem>>, vector<8x128xf32>
    tpu.vector_store %arg4[%c0_10, %c0_11], %26 {strides = array<i32>} : memref<8x128xf32, #tpu.memory_space<vmem>>, vector<8x128xf32>,
    return
  }
  func.func @transform_0(%arg0: i32) -> (i32, i32) {
    %c0_i32 = arith.constant 0 : i32
    %c0_i32_0 = arith.constant 0 : i32
    return %arg0, %c0_i32 : i32, i32
  }
  func.func @transform_1(%arg0: i32) -> (i32, i32) {
    %c0_i32 = arith.constant 0 : i32
    %c0_i32_0 = arith.constant 0 : i32
    return %arg0, %c0_i32 : i32, i32
  }
  func.func @transform_2(%arg0: i32) -> (i32, i32) {
    %c0_i32 = arith.constant 0 : i32
    %c0_i32_0 = arith.constant 0 : i32
    return %arg0, %c0_i32 : i32, i32
  }
  func.func @transform_3(%arg0: i32) -> (i32, i32) {
    %c0_i32 = arith.constant 0 : i32
    %c0_i32_0 = arith.constant 0 : i32
    return %arg0, %c0_i32 : i32, i32
  }
}

</mosaic_0001>

<llo_original>
// kernel: tpu_custom_call.1
$region0: #{tpu_custom_call.1}
  #allocation0 [shape = 'u32[]', space=smem, size = 0x4, offset = 0x4, fixed_abs, tag = 'smem constant byte address 0x4 - core index']
  #allocation1 [shape = 'u32[144,128]{1,0:T(1,128)}', space=vmem, size = 0x12000, scoped, tag = 'internal scratch']
  %s0 = inlined_call_operand.hbm [shape: f32[8,128], index: 0, kind: input, shape index: {}]
  %s1 = inlined_call_operand.hbm [shape: f32[8,128], index: 1, kind: input, shape index: {}]
  %s2 = inlined_call_operand.hbm [shape: f32[8,128], index: 2, kind: input, shape index: {}]
  %s3 = inlined_call_operand.hbm [shape: f32[8,128], index: 3, kind: output, shape index: {}]
  %s4 = sld [smem:[#allocation0]]
  $region34: #{tpu_custom_call.1} parent=0
    _
  %s6 = ssub.s32 1, %s4
  %s7 = scalar_select 0, %s6, %s4
  $region1: #{tpu_custom_call.1} parent=0
    #allocation2 [shape = 'u8[4096]{0}', space=vmem, size = 0x1000, scoped, tag = 'input window, operand 0, single buffered']
    #allocation3 [shape = 's32[1]{0}', space=sflag, size = 0x4, scoped, tag = 'scoped memory for tpu_custom_call.1']
    #allocation4 [shape = 's32[1]{0}', space=sflag, size = 0x4, scoped, tag = 'scoped memory for tpu_custom_call.1']
    #allocation5 [shape = 'u8[4096]{0}', space=vmem, size = 0x1000, scoped, tag = 'input window, operand 1, single buffered']
    #allocation6 [shape = 's32[1]{0}', space=sflag, size = 0x4, scoped, tag = 'scoped memory for tpu_custom_call.1']
    #allocation7 [shape = 'u8[4096]{0}', space=vmem, size = 0x1000, scoped, tag = 'input window, operand 2, single buffered']
    #allocation8 [shape = 'u8[4096]{0}', space=vmem, size = 0x1000, scoped, tag = 'output window, operand 0, single buffered']
    %8 = vsyncpa [#allocation3], 0
    %9 = vsyncpa [#allocation6], 0
    %10 = vsyncpa [#allocation4], 0
    // Predicated region
    $region2: #{tpu_custom_call.1} parent=1 // pred_check
      _
    $region3: #{tpu_custom_call.1} parent=1 // pred_check_branch
      %12 = sbr.rel (0) target = $region5
    $region4: #{tpu_custom_call.1} parent=1 // pred_region
      %s14 = ssub.s32 128, 128
      %15 = vsyncadd [#allocation3], %s14
      %s17 = sshll.u32 [#allocation2], 4
      %s18 = int_to_ptr.vmem [resolvable:$true] %s17
      %20 = dma.hbm_to_vmem [thread:$0]  %s0, 128, %s18, [#allocation3]
    $region5: #{tpu_custom_call.1} parent=1 // pred_fallthru
      _
    // Predicated region
    $region6: #{tpu_custom_call.1} parent=1 // pred_check
      _
    $region7: #{tpu_custom_call.1} parent=1 // pred_check_branch
      %22 = sbr.rel (0) target = $region9
    $region8: #{tpu_custom_call.1} parent=1 // pred_region
      %s24 = ssub.s32 128, 128
      %25 = vsyncadd [#allocation6], %s24
      %s27 = sshll.u32 [#allocation5], 4
      %s28 = int_to_ptr.vmem [resolvable:$true] %s27
      %30 = dma.hbm_to_vmem [thread:$0]  %s1, 128, %s28, [#allocation6]
    $region9: #{tpu_custom_call.1} parent=1 // pred_fallthru
      _
    // Predicated region
    $region10: #{tpu_custom_call.1} parent=1 // pred_check
      _
    $region11: #{tpu_custom_call.1} parent=1 // pred_check_branch
      %32 = sbr.rel (0) target = $region13
    $region12: #{tpu_custom_call.1} parent=1 // pred_region
      %s34 = ssub.s32 128, 128
      %35 = vsyncadd [#allocation6], %s34
      %s37 = sshll.u32 [#allocation7], 4
      %s38 = int_to_ptr.vmem [resolvable:$true] %s37
      %40 = dma.hbm_to_vmem [thread:$0]  %s2, 128, %s38, [#allocation6]
    $region13: #{tpu_custom_call.1} parent=1 // pred_fallthru
      _
    // Predicated region
    $region14: #{tpu_custom_call.1} parent=1 // pred_check
      _
    $region15: #{tpu_custom_call.1} parent=1 // pred_check_branch
      %42 = sbr.rel (0) target = $region17
    $region16: #{tpu_custom_call.1} parent=1 // pred_region
      %43 = dma.done [#allocation3], 128
    $region17: #{tpu_custom_call.1} parent=1 // pred_fallthru
      _
    // Predicated region
    $region18: #{tpu_custom_call.1} parent=1 // pred_check
      _
    $region19: #{tpu_custom_call.1} parent=1 // pred_check_branch
      %45 = sbr.rel (0) target = $region21
    $region20: #{tpu_custom_call.1} parent=1 // pred_region
      %46 = dma.done [#allocation6], 128
    $region21: #{tpu_custom_call.1} parent=1 // pred_fallthru
      _
    // Predicated region
    $region22: #{tpu_custom_call.1} parent=1 // pred_check
      _
    $region23: #{tpu_custom_call.1} parent=1 // pred_check_branch
      %48 = sbr.rel (0) target = $region25
    $region24: #{tpu_custom_call.1} parent=1 // pred_region
      %49 = dma.done [#allocation6], 128
    $region25: #{tpu_custom_call.1} parent=1 // pred_fallthru
      _
    %v50 = vld [vmem:[#allocation7] sm:$0xff]
    %vm51 = vcmp.ne.f32.partialorder %v50, 0.0
    %v52 = vld [vmem:[#allocation2] sm:$0xff]
    %v53 = vld [vmem:[#allocation5] sm:$0xff]
    %v54 = vsub.f32 %v52, %v53
    %v55 = vsel %vm51, %v54, 0.0
    %v56 = vmul.f32 %v55, %v55
    %v57 = vrot.slane %v56, 4
    %v58 = vadd.f32 %v56, %v57
    %v59 = vrot.slane %v58, 2
    %v60 = vadd.f32 %v58, %v59
    %v61 = vrot.slane %v60, 1
    %v62 = vadd.f32 %v60, %v61
    %v63 = vrot.slane %v50, 4
    %v64 = vadd.f32 %v50, %v63
    %v65 = vrot.slane %v64, 2
    %v66 = vadd.f32 %v64, %v65
    %v67 = vrot.slane %v66, 1
    %v68 = vadd.f32 %v66, %v67
    %v69 = vlaneseq
    %v70 = vshrl.u32 %v69, 7
    %vm71 = vcmp.eq.s32.totalorder %v70, 0
    %v72 = vsel %vm71, %v62, 0.0
    %vm73 = vcmp.eq.s32.totalorder %v70, 1
    %v74 = vsel %vm73, %v68, 0.0
    %v75 = vadd.f32 %v72, %v74
    %76 = vst [vmem:[#allocation8] sm:$0xff] %v75
    // Predicated region
    $region26: #{tpu_custom_call.1} parent=1 // pred_check
      _
    $region27: #{tpu_custom_call.1} parent=1 // pred_check_branch
      %78 = sbr.rel (0) target = $region29
    $region28: #{tpu_custom_call.1} parent=1 // pred_region
      %s80 = ssub.s32 128, 128
      %81 = vsyncadd [#allocation4], %s80
      %s83 = sshll.u32 [#allocation8], 4
      %s84 = int_to_ptr.vmem [resolvable:$true] %s83
      %86 = dma.vmem_to_hbm [thread:$0]  %s84, 128, %s3, [#allocation4]
    $region29: #{tpu_custom_call.1} parent=1 // pred_fallthru
      _
    // Predicated region
    $region30: #{tpu_custom_call.1} parent=1 // pred_check
      _
    $region31: #{tpu_custom_call.1} parent=1 // pred_check_branch
      %88 = sbr.rel (0) target = $region33
    $region32: #{tpu_custom_call.1} parent=1 // pred_region
      %89 = dma.done [#allocation4], 128
    $region33: #{tpu_custom_call.1} parent=1 // pred_fallthru
      _
    %90 = vsyncpa [#allocation3], 1
    %91 = vsyncpa [#allocation6], 1
    %92 = vsyncpa [#allocation4], 1

</llo_original>
